<compile_context>
chip_gen: v6e
topology: v6e:2x2x1
jax: 0.10.0
libtpu: 0.0.40
codegen_flags: <defaults>
</compile_context>

<pallas_src>
import functools

import jax
import jax.numpy as jnp
from jax.experimental import pallas as pl
from jax.experimental.pallas import tpu as pltpu


# ----------------------------------------------------------------------------
# Kernel 1: K / V 1x1-conv projection, computed ONCE per (batch, pixel tile).
# ----------------------------------------------------------------------------
def _kv_proj_kernel(x_ref, wk_ref, bk_ref, wv_ref, bv_ref, kt_ref, v_ref, *,
                    compute_dtype):
    """x: (1, C, T) f32;  Wk: (C8, C);  Wv: (C, C)  (both compute_dtype).

    Writes K^T tile (1, T, C8) and V tile (1, C, T), both in compute_dtype.
    """
    x = x_ref[0].astype(compute_dtype)                               # (C, T)
    k = (jnp.dot(wk_ref[...], x, preferred_element_type=jnp.float32)
         + bk_ref[...])                                              # (C8, T) f32
    v = (jnp.dot(wv_ref[...], x, preferred_element_type=jnp.float32)
         + bv_ref[...])                                              # (C, T)  f32
    # Store K pre-transposed so the attention-kernel score matmul is a plain
    # NN matmul.  The transpose is tiny (C8 = C/8 sublanes) and happens once
    # per pixel tile total (not once per query tile).
    kt_ref[0] = k.T.astype(kt_ref.dtype)                             # (T, C8)
    v_ref[0] = v.astype(v_ref.dtype)                                 # (C, T)


def _project_kv(x_cn, wk, bk, wv, bv, *, tile, compute_dtype):
    B, C, N = x_cn.shape
    C8 = wk.shape[0]
    kernel = functools.partial(_kv_proj_kernel, compute_dtype=compute_dtype)
    return pl.pallas_call(
        kernel,
        out_shape=(jax.ShapeDtypeStruct((B, N, C8), compute_dtype),   # K^T
                   jax.ShapeDtypeStruct((B, C, N), compute_dtype)),   # V
        grid_spec=pltpu.PrefetchScalarGridSpec(
            num_scalar_prefetch=0,
            grid=(B, N // tile),
            in_specs=[
                pl.BlockSpec((1, C, tile), lambda b, n: (b, 0, n)),   # x tile
                pl.BlockSpec((C8, C), lambda b, n: (0, 0)),           # Wk
                pl.BlockSpec((C8, 1), lambda b, n: (0, 0)),           # bk
                pl.BlockSpec((C, C), lambda b, n: (0, 0)),            # Wv
                pl.BlockSpec((C, 1), lambda b, n: (0, 0)),            # bv
            ],
            out_specs=(
                pl.BlockSpec((1, tile, C8), lambda b, n: (b, n, 0)),  # K^T
                pl.BlockSpec((1, C, tile), lambda b, n: (b, 0, n)),   # V
            ),
        ),
        compiler_params=pltpu.CompilerParams(
            dimension_semantics=("parallel", "parallel"),
            vmem_limit_bytes=32 * 1024 * 1024,
        ),
    )(x_cn, wk, bk, wv, bv)


# ----------------------------------------------------------------------------
# Kernel 2: flash-tiled attention + gamma residual.
# Grid = (batch, query tile, kv tile); kv is the (arbitrary) reduction axis.
# ----------------------------------------------------------------------------
def _attn_kernel(xq_ref, kt_ref, v_ref, wq_ref, bq_ref, gamma_ref, o_ref,
                 q_scr, m_scr, l_scr, acc_scr, *, compute_dtype):
    """xq: (1, C, TQ) f32 (query-pixel features, also the residual input)
    kt : (1, TK, C8) compute_dtype (precomputed, pre-transposed keys)
    v  : (1, C, TK)  compute_dtype (precomputed values, channel-major)
    wq : (C8, C) compute_dtype; bq: (C8, 1) f32; gamma: (1,1) f32 in SMEM
    o  : (1, C, TQ) f32
    scratch: q (C8, TQ) compute_dtype; m/l (1, TQ) f32; acc (C, TQ) f32
    """
    ki = pl.program_id(2)

    # ---- per-query-tile init: project Q once, reset softmax state ----------
    @pl.when(ki == 0)
    def _init():
        q = (jnp.dot(wq_ref[...], xq_ref[0].astype(compute_dtype),
                     preferred_element_type=jnp.float32)
             + bq_ref[...])                                          # (C8, TQ) f32
        q_scr[...] = q.astype(q_scr.dtype)                           # cast once
        m_scr[...] = jnp.full(m_scr.shape, -jnp.inf, dtype=m_scr.dtype)
        l_scr[...] = jnp.zeros(l_scr.shape, dtype=l_scr.dtype)
        acc_scr[...] = jnp.zeros(acc_scr.shape, dtype=acc_scr.dtype)

    # ---- scores (transposed): (TK, C8) @ (C8, TQ) -> (TK, TQ), plain NN ----
    s_t = jnp.dot(kt_ref[0], q_scr[...], preferred_element_type=jnp.float32)

    # ---- online softmax over the kv (sublane) axis; stats are (1, TQ) ------
    m_prev = m_scr[...]
    m_new = jnp.maximum(m_prev, jnp.max(s_t, axis=0, keepdims=True))
    alpha = jnp.exp(m_prev - m_new)                                  # (1, TQ)
    p_t = jnp.exp(s_t - m_new)                                       # (TK, TQ) f32
    l_scr[...] = alpha * l_scr[...] + jnp.sum(p_t, axis=0, keepdims=True)
    # acc (C, TQ) += V (C, TK) @ P^T (TK, TQ): plain NN matmul on the MXU.
    acc_scr[...] = alpha * acc_scr[...] + jnp.dot(
        v_ref[0], p_t.astype(compute_dtype), preferred_element_type=jnp.float32)
    m_scr[...] = m_new

    # ---- finalize: normalize, gamma-scaled residual, lane-dense store ------
    @pl.when(ki == pl.num_programs(2) - 1)
    def _finalize():
        # Exact reciprocal in the f32 path (tight unit test); EUP-approx
        # reciprocal (free slot) in the production bf16 path.
        approx = compute_dtype != jnp.dtype(jnp.float32)
        out_cn = acc_scr[...] * pl.reciprocal(l_scr[...], approx=approx)
        o_ref[0] = gamma_ref[0, 0] * out_cn + xq_ref[0]


def self_attention(x_nchw, wq, bq, wk, bk, wv, bv, gamma, *,
                   tq=256, tk=256, compute_dtype=jnp.bfloat16):
    """SAGAN self-attention forward.

    x_nchw: (B, C, H, W) float32
    wq, wk: (C//8, C) 1x1-conv weights in PyTorch (C_out, C_in) layout
    wv    : (C, C);  bq, bk: (C//8,), bv: (C,), gamma: (1,)
    compute_dtype: MXU operand dtype (f32 accumulation always); bfloat16 is
    the production default, float32 reproduces the reference to ~1e-5.
    Pass tk = H*W for the single-kv-tile fast path when the working set fits.
    """
    B, C, H, W = x_nchw.shape
    N = H * W
    C8 = wq.shape[0]
    compute_dtype = jnp.dtype(compute_dtype)

    # Free reshape: x stays channel-major, pixels land on the 128-lane axis.
    x_cn = x_nchw.reshape(B, C, N).astype(jnp.float32)

    tq = min(tq, N)
    tk = min(tk, N)
    assert N % tq == 0 and N % tk == 0, "H*W must be divisible by the tile sizes"

    # One-time, weight-sized casts / layout fixes (not activation traffic).
    wq_k = wq.astype(compute_dtype)                      # (C8, C)
    bq_k = bq.reshape(C8, 1).astype(jnp.float32)
    wk_k = wk.astype(compute_dtype)                      # (C8, C)
    bk_k = bk.reshape(C8, 1).astype(jnp.float32)
    wv_k = wv.astype(compute_dtype)                      # (C, C)
    bv_k = bv.reshape(C, 1).astype(jnp.float32)
    gamma_k = jnp.asarray(gamma, jnp.float32).reshape(1, 1)

    # ---- Stage 1: K^T (B,N,C8) and V (B,C,N), projected once per batch -----
    k_t, v_cn = _project_kv(x_cn, wk_k, bk_k, wv_k, bv_k,
                            tile=tk, compute_dtype=compute_dtype)

    # ---- Stage 2: flash attention + gamma residual --------------------------
    kernel = functools.partial(_attn_kernel, compute_dtype=compute_dtype)
    grid = (B, N // tq, N // tk)
    out_cn = pl.pallas_call(
        kernel,
        out_shape=jax.ShapeDtypeStruct((B, C, N), jnp.float32),
        grid_spec=pltpu.PrefetchScalarGridSpec(
            num_scalar_prefetch=0,
            grid=grid,
            in_specs=[
                pl.BlockSpec((1, C, tq), lambda b, qi, ki: (b, 0, qi)),   # x (q tile)
                pl.BlockSpec((1, tk, C8), lambda b, qi, ki: (b, ki, 0)),  # K^T tile
                pl.BlockSpec((1, C, tk), lambda b, qi, ki: (b, 0, ki)),   # V tile
                pl.BlockSpec((C8, C), lambda b, qi, ki: (0, 0)),          # Wq
                pl.BlockSpec((C8, 1), lambda b, qi, ki: (0, 0)),          # bq
                pl.BlockSpec(memory_space=pltpu.MemorySpace.SMEM),        # gamma
            ],
            out_specs=pl.BlockSpec((1, C, tq), lambda b, qi, ki: (b, 0, qi)),
            scratch_shapes=[
                pltpu.VMEM((C8, tq), compute_dtype),   # Q for current query tile
                pltpu.VMEM((1, tq), jnp.float32),      # running max  m
                pltpu.VMEM((1, tq), jnp.float32),      # running sum  l
                pltpu.VMEM((C, tq), jnp.float32),      # running numerator acc
            ],
        ),
        compiler_params=pltpu.CompilerParams(
            # batch / query tiles shard across TensorCores; kv axis carries the
            # online-softmax state so it must stay "arbitrary".
            dimension_semantics=("parallel", "parallel", "arbitrary"),
            vmem_limit_bytes=32 * 1024 * 1024,
        ),
    )(x_cn, k_t, v_cn, wq_k, bq_k, gamma_k)

    return out_cn.reshape(B, C, H, W)


def reference(x, wq, bq, wk, bk, wv, bv, gamma):
    """Pure-JAX mirror of the PyTorch module (weights in (C_out, C_in) layout)."""
    B, C, H, W = x.shape
    N = H * W
    hi = jax.lax.Precision.HIGHEST
    xf = x.reshape(B, C, N)                                            # (B, C, N)
    q = jnp.einsum('oc,bcn->bon', wq, xf, precision=hi) + bq[None, :, None]
    k = jnp.einsum('oc,bcn->bon', wk, xf, precision=hi) + bk[None, :, None]
    v = jnp.einsum('oc,bcn->bon', wv, xf, precision=hi) + bv[None, :, None]
    energy = jnp.einsum('bdi,bdj->bij', q, k, precision=hi)            # Q^T K
    attn = jax.nn.softmax(energy, axis=-1)
    out = jnp.einsum('bcj,bij->bci', v, attn, precision=hi)            # V attn^T
    return gamma.reshape(()) * out.reshape(B, C, H, W) + x


if __name__ == "__main__":
    B, C, H, W = 2, 64, 16, 16          # N = 256, C8 = 8
    C8 = C // 8

    key = jax.random.PRNGKey(0)
    kx, kq, kbq, kk, kbk, kv_, kbv = jax.random.split(key, 7)

    x = jax.random.normal(kx, (B, C, H, W), dtype=jnp.float32)

    # Conv2d 1x1 params in PyTorch layout: weight (C_out, C_in), bias (C_out,)
    scale = 0.05
    wq = jax.random.normal(kq, (C8, C), dtype=jnp.float32) * scale
    bq = jax.random.normal(kbq, (C8,), dtype=jnp.float32) * scale
    wk = jax.random.normal(kk, (C8, C), dtype=jnp.float32) * scale
    bk = jax.random.normal(kbk, (C8,), dtype=jnp.float32) * scale
    wv = jax.random.normal(kv_, (C, C), dtype=jnp.float32) * scale
    bv = jax.random.normal(kbv, (C,), dtype=jnp.float32) * scale
    # gamma is zero-initialized in the module; use a nonzero value so the
    # attention path is actually exercised by the checks.
    gamma = jnp.array([0.5], dtype=jnp.float32)

    ref = reference(x, wq, bq, wk, bk, wv, bv, gamma)

    # Exact path (f32 operands), small tiles so the multi-kv-tile online
    # softmax rescale path is exercised.
    out_f32 = self_attention(x, wq, bq, wk, bk, wv, bv, gamma,
                             tq=128, tk=128, compute_dtype=jnp.float32)
    out_f32 = jax.block_until_ready(out_f32)
    assert out_f32.shape == ref.shape
    err32 = jnp.max(jnp.abs(out_f32 - ref))
    assert jnp.allclose(out_f32, ref, atol=1e-4, rtol=1e-4), (
        f"f32 mismatch, max abs err={err32}")

    # Production path: bf16 MXU operands with f32 accumulation, default tiles
    # (clamped to N here -> single-kv-tile fast path).  Looser tolerance: the
    # SAGAN energies are unscaled so bf16 score rounding is a few ULPs loose.
    out_bf16 = self_attention(x, wq, bq, wk, bk, wv, bv, gamma)
    out_bf16 = jax.block_until_ready(out_bf16)
    errbf = jnp.max(jnp.abs(out_bf16 - ref))
    assert jnp.allclose(out_bf16, ref, atol=3e-2, rtol=3e-2), (
        f"bf16 mismatch, max abs err={errbf}")

    print("KERNEL_OK")
</pallas_src>

<mosaic_0001>
module attributes {stable_mosaic.version = 11 : i64} {
  func.func @_kv_proj_kernel(%arg0: i32, %arg1: i32, %arg2: memref<1x64x128xf32, #tpu.memory_space<vmem>>, %arg3: memref<8x64xf32, #tpu.memory_space<vmem>>, %arg4: memref<8x1xf32, #tpu.memory_space<vmem>>, %arg5: memref<64x64xf32, #tpu.memory_space<vmem>>, %arg6: memref<64x1xf32, #tpu.memory_space<vmem>>, %arg7: memref<1x128x8xf32, #tpu.memory_space<vmem>>, %arg8: memref<1x64x128xf32, #tpu.memory_space<vmem>>) attributes {dimension_semantics = [#tpu.dimension_semantics<parallel>, #tpu.dimension_semantics<parallel>], iteration_bounds = array<i64: 2, 2>, scalar_prefetch = 0 : i64, scratch_operands = 0 : i64, tpu.core_type = #tpu.core_type<tc>, window_params = [{transform_indices = @transform_0, window_bounds = array<i64: 1, 64, 128>}, {pipeline_mode = #tpu.pipeline_mode<synchronous>, transform_indices = @transform_1, window_bounds = array<i64: 8, 64>}, {pipeline_mode = #tpu.pipeline_mode<synchronous>, transform_indices = @transform_2, window_bounds = array<i64: 8, 1>}, {pipeline_mode = #tpu.pipeline_mode<synchronous>, transform_indices = @transform_3, window_bounds = array<i64: 64, 64>}, {pipeline_mode = #tpu.pipeline_mode<synchronous>, transform_indices = @transform_4, window_bounds = array<i64: 64, 1>}, {transform_indices = @transform_5, window_bounds = array<i64: 1, 128, 8>}, {transform_indices = @transform_6, window_bounds = array<i64: 1, 64, 128>}]} {
    %c0 = arith.constant 0 : index
    %c0_0 = arith.constant 0 : index
    %c0_1 = arith.constant 0 : index
    %0 = vector.load %arg2[%c0, %c0_0, %c0_1] : memref<1x64x128xf32, #tpu.memory_space<vmem>>, vector<1x64x128xf32>
    %1 = vector.shape_cast %0 : vector<1x64x128xf32> to vector<64x128xf32>
    %c0_2 = arith.constant 0 : index
    %c0_3 = arith.constant 0 : index
    %2 = vector.load %arg3[%c0_2, %c0_3] : memref<8x64xf32, #tpu.memory_space<vmem>>, vector<8x64xf32>
    %cst = arith.constant dense<0.000000e+00> : vector<8x128xf32>
    %3 = tpu.matmul %2, %1, %cst {dimension_numbers = #tpu.dot_dimension_numbers<[1], [0], [0], [1], [0, 0, 1, 1], [], []>} : vector<8x64xf32>, vector<64x128xf32>, vector<8x128xf32> -> vector<8x128xf32>
    %c0_4 = arith.constant 0 : index
    %c0_5 = arith.constant 0 : index
    %4 = vector.load %arg4[%c0_4, %c0_5] : memref<8x1xf32, #tpu.memory_space<vmem>>, vector<8x1xf32>
    %5 = vector.broadcast %4 : vector<8x1xf32> to vector<8x128xf32>
    %6 = arith.addf %3, %5 : vector<8x128xf32>
    %c0_6 = arith.constant 0 : index
    %c0_7 = arith.constant 0 : index
    %7 = vector.load %arg5[%c0_6, %c0_7] : memref<64x64xf32, #tpu.memory_space<vmem>>, vector<64x64xf32>
    %cst_8 = arith.constant dense<0.000000e+00> : vector<64x128xf32>
    %8 = tpu.matmul %7, %1, %cst_8 {dimension_numbers = #tpu.dot_dimension_numbers<[1], [0], [0], [1], [0, 0, 1, 1], [], []>} : vector<64x64xf32>, vector<64x128xf32>, vector<64x128xf32> -> vector<64x128xf32>
    %c0_9 = arith.constant 0 : index
    %c0_10 = arith.constant 0 : index
    %9 = vector.load %arg6[%c0_9, %c0_10] : memref<64x1xf32, #tpu.memory_space<vmem>>, vector<64x1xf32>
    %10 = vector.broadcast %9 : vector<64x1xf32> to vector<64x128xf32>
    %11 = arith.addf %8, %10 : vector<64x128xf32>
    %12 = tpu.transpose %6, [1, 0] : vector<8x128xf32> -> vector<128x8xf32>
    %c0_11 = arith.constant 0 : index
    %c0_12 = arith.constant 0 : index
    %c0_13 = arith.constant 0 : index
    %13 = vector.load %arg7[%c0_11, %c0_12, %c0_13] : memref<1x128x8xf32, #tpu.memory_space<vmem>>, vector<1x128x8xf32>
    %14 = vector.shape_cast %13 : vector<1x128x8xf32> to vector<128x8xf32>
    %15 = vector.shape_cast %12 : vector<128x8xf32> to vector<1x128x8xf32>
    tpu.vector_store %arg7[%c0_11, %c0_12, %c0_13], %15 {strides = array<i32>} : memref<1x128x8xf32, #tpu.memory_space<vmem>>, vector<1x128x8xf32>,
    %c0_14 = arith.constant 0 : index
    %c0_15 = arith.constant 0 : index
    %c0_16 = arith.constant 0 : index
    %16 = vector.load %arg8[%c0_14, %c0_15, %c0_16] : memref<1x64x128xf32, #tpu.memory_space<vmem>>, vector<1x64x128xf32>
    %17 = vector.shape_cast %16 : vector<1x64x128xf32> to vector<64x128xf32>
    %18 = vector.shape_cast %11 : vector<64x128xf32> to vector<1x64x128xf32>
    tpu.vector_store %arg8[%c0_14, %c0_15, %c0_16], %18 {strides = array<i32>} : memref<1x64x128xf32, #tpu.memory_space<vmem>>, vector<1x64x128xf32>,
    return
  }
  func.func @transform_0(%arg0: i32, %arg1: i32) -> (i32, i32, i32) {
    %c0_i32 = arith.constant 0 : i32
    %c0_i32_0 = arith.constant 0 : i32
    return %arg0, %c0_i32, %arg1 : i32, i32, i32
  }
  func.func @transform_1(%arg0: i32, %arg1: i32) -> (i32, i32) {
    %c0_i32 = arith.constant 0 : i32
    %c0_i32_0 = arith.constant 0 : i32
    %c0_i32_1 = arith.constant 0 : i32
    return %c0_i32, %c0_i32_0 : i32, i32
  }
  func.func @transform_2(%arg0: i32, %arg1: i32) -> (i32, i32) {
    %c0_i32 = arith.constant 0 : i32
    %c0_i32_0 = arith.constant 0 : i32
    %c0_i32_1 = arith.constant 0 : i32
    return %c0_i32, %c0_i32_0 : i32, i32
  }
  func.func @transform_3(%arg0: i32, %arg1: i32) -> (i32, i32) {
    %c0_i32 = arith.constant 0 : i32
    %c0_i32_0 = arith.constant 0 : i32
    %c0_i32_1 = arith.constant 0 : i32
    return %c0_i32, %c0_i32_0 : i32, i32
  }
  func.func @transform_4(%arg0: i32, %arg1: i32) -> (i32, i32) {
    %c0_i32 = arith.constant 0 : i32
    %c0_i32_0 = arith.constant 0 : i32
    %c0_i32_1 = arith.constant 0 : i32
    return %c0_i32, %c0_i32_0 : i32, i32
  }
  func.func @transform_5(%arg0: i32, %arg1: i32) -> (i32, i32, i32) {
    %c0_i32 = arith.constant 0 : i32
    %c0_i32_0 = arith.constant 0 : i32
    return %arg0, %arg1, %c0_i32 : i32, i32, i32
  }
  func.func @transform_6(%arg0: i32, %arg1: i32) -> (i32, i32, i32) {
    %c0_i32 = arith.constant 0 : i32
    %c0_i32_0 = arith.constant 0 : i32
    return %arg0, %c0_i32, %arg1 : i32, i32, i32
  }
}

</mosaic_0001>

<llo_original>
// kernel: tpu_custom_call.1
$region0: #{tpu_custom_call.1}
  #allocation0 [shape = 'u32[]', space=smem, size = 0x4, offset = 0x4, fixed_abs, tag = 'smem constant byte address 0x4 - core index']
  #allocation1 [shape = 'u32[144,128]{1,0:T(1,128)}', space=vmem, size = 0x12000, scoped, tag = 'internal scratch']
  %s0 = inlined_call_operand.hbm [shape: f32[2,64,256], index: 0, kind: input, shape index: {}]
  %s1 = inlined_call_operand.vmem [shape: f32[8,64], index: 1, kind: input, shape index: {}]
  %s2 = inlined_call_operand.vmem [shape: f32[8,1], index: 2, kind: input, shape index: {}]
  %s3 = inlined_call_operand.vmem [shape: f32[64,64], index: 3, kind: input, shape index: {}]
  %s4 = inlined_call_operand.vmem [shape: f32[64,1], index: 4, kind: input, shape index: {}]
  %s5 = inlined_call_operand.vmem [shape: f32[2,256,8], index: 5, kind: output, shape index: {0}]
  %s6 = inlined_call_operand.hbm [shape: f32[2,64,256], index: 6, kind: output, shape index: {1}]
  %7 = xla_tuple %s5, %s6
  %s8 = sld [smem:[#allocation0]]
  $region65: #{tpu_custom_call.1} parent=0
    _
  %s10 = ssub.s32 1, %s8
  %s11 = scalar_select 0, %s10, %s8
  $region1: #{tpu_custom_call.1} parent=0
    #allocation2 [shape = 'u8[65536]{0}', space=vmem, size = 0x10000, scoped, tag = 'input window, operand 0']
    #allocation3 [shape = 's32[2]{0}', space=sflag, size = 0x8, scoped, tag = 'scoped memory for tpu_custom_call.1']
    #allocation4 [shape = 's32[2]{0}', space=sflag, size = 0x8, scoped, tag = 'scoped memory for tpu_custom_call.1']
    #allocation5 [shape = 'u8[65536]{0}', space=vmem, size = 0x10000, scoped, tag = 'output window, operand 1']
    %12 = vsyncpa [#allocation3], 0
    %s13 = scalar_lea.sflag [#allocation3], 1
    %14 = vsyncpa %s13, 0
    %15 = vsyncpa [#allocation4], 0
    %s16 = scalar_lea.sflag [#allocation4], 1
    %17 = vsyncpa %s16, 0
    loop: start=0, step=1, limit=6
    $region2: #{tpu_custom_call.1} parent=1 // loop_pre_header
      _
    $region3: #{tpu_custom_call.1} parent=1 // loop_header
      %s19 = sphi 0, %s23
      %p20 = scmp.ge.s32.totalorder %s19, 6
      %s26 = sphi 0, %s38
      %s27 = sphi 0, %s34
      %s28 = sphi 0, %s26
      %s29 = sphi 0, %s27
      %s30 = sphi 0, %s28
      %s31 = sphi 0, %s29
      %s43 = sphi 0, %s45
      %s46 = sphi 0, %s43
      %s47 = sphi 0, %s46
      %s63 = sphi 0, %s47
      %s67 = sphi 0, %s67
      %s69 = sphi 0, %s67
      %s70 = sphi 0, %s69
      %s84 = sphi 0, %s70
      %s88 = sphi 0, %s88
      %s90 = sphi 0, %s88
      %s91 = sphi 0, %s90
      %s105 = sphi 0, %s91
      %s109 = sphi 0, %s109
      %s111 = sphi 0, %s109
      %s112 = sphi 0, %s111
      %s126 = sphi 0, %s112
      %s130 = sphi 0, %s130
      %s132 = sphi 0, %s130
      %s133 = sphi 0, %s132
      %s147 = sphi 0, %s133
      %s155 = sphi 0, %s157
      %s158 = sphi 0, %s155
      %s159 = sphi 0, %s158
      %s175 = sphi 0, %s159
      %s183 = sphi 0, %s185
      %s186 = sphi 0, %s183
      %s187 = sphi 0, %s186
      %s203 = sphi 0, %s187
    $region4: #{tpu_custom_call.1} parent=1 // loop_header_branch
      %22 = sbr.rel (%p20) target = $region8
    $region5: #{tpu_custom_call.1} parent=1 // loop_body
      %s24 = ssub.s32 %s19, 1
      %s25 = ssub.s32 %s19, 2
      %s32 = sadd.s32 1, %s27
      %p33 = scmp.ge.s32.totalorder %s32, 2
      %s34 = scalar_select %p33, 0, %s32
      %s35 = sadd.s32 1, %s26
      %s36 = scalar_select %p33, %s35, %s26
      %p37 = scmp.ge.s32.totalorder %s36, 2
      %s38 = scalar_select %p37, 0, %s36
      %s39 = ssub.s32 %s26, %s38
      %s40 = ssub.s32 %s27, %s34
      %s41 = sor.u32 %s39, %s40
      %p42 = scmp.eq.s32.totalorder %s41, 0
      %s44 = sadd.s32 %s43, 1
      %s45 = scalar_select %p42, %s43, %s44
      %p48 = pneg %p42
      %p49 = scmp.eq.s32.totalorder %s19, 3
      %p50 = por %p48, %p49
      %p51 = scmp.ne.s32.totalorder %s43, %s46
      %p52 = scmp.eq.s32.totalorder %s19, 0
      %p53 = por %p51, %p52
      %p54 = scmp.ne.s32.totalorder %s43, %s46
      %p55 = scmp.eq.s32.totalorder %s24, 3
      %p56 = por %p54, %p55
      %p57 = scmp.ne.s32.totalorder %s46, %s47
      %p58 = scmp.eq.s32.totalorder %s24, 0
      %p59 = por %p57, %p58
      %p60 = scmp.ne.s32.totalorder %s46, %s47
      %p61 = scmp.eq.s32.totalorder %s25, 3
      %p62 = por %p60, %p61
      %p64 = scmp.ne.s32.totalorder %s47, %s63
      %p65 = scmp.eq.s32.totalorder %s25, 0
      %p66 = por %p64, %p65
      %s68 = sadd.s32 %s67, 1
      %p71 = scmp.eq.s32.totalorder %s19, 3
      %p72 = scmp.ne.s32.totalorder %s67, %s69
      %p73 = scmp.eq.s32.totalorder %s19, 0
      %p74 = por %p72, %p73
      %p75 = scmp.ne.s32.totalorder %s67, %s69
      %p76 = scmp.eq.s32.totalorder %s24, 3
      %p77 = por %p75, %p76
      %p78 = scmp.ne.s32.totalorder %s69, %s70
      %p79 = scmp.eq.s32.totalorder %s24, 0
      %p80 = por %p78, %p79
      %p81 = scmp.ne.s32.totalorder %s69, %s70
      %p82 = scmp.eq.s32.totalorder %s25, 3
      %p83 = por %p81, %p82
      %p85 = scmp.ne.s32.totalorder %s70, %s84
      %p86 = scmp.eq.s32.totalorder %s25, 0
      %p87 = por %p85, %p86
      %s89 = sadd.s32 %s88, 1
      %p92 = scmp.eq.s32.totalorder %s19, 3
      %p93 = scmp.ne.s32.totalorder %s88, %s90
      %p94 = scmp.eq.s32.totalorder %s19, 0
      %p95 = por %p93, %p94
      %p96 = scmp.ne.s32.totalorder %s88, %s90
      %p97 = scmp.eq.s32.totalorder %s24, 3
      %p98 = por %p96, %p97
      %p99 = scmp.ne.s32.totalorder %s90, %s91
      %p100 = scmp.eq.s32.totalorder %s24, 0
      %p101 = por %p99, %p100
      %p102 = scmp.ne.s32.totalorder %s90, %s91
      %p103 = scmp.eq.s32.totalorder %s25, 3
      %p104 = por %p102, %p103
      %p106 = scmp.ne.s32.totalorder %s91, %s105
      %p107 = scmp.eq.s32.totalorder %s25, 0
      %p108 = por %p106, %p107
      %s110 = sadd.s32 %s109, 1
      %p113 = scmp.eq.s32.totalorder %s19, 3
      %p114 = scmp.ne.s32.totalorder %s109, %s111
      %p115 = scmp.eq.s32.totalorder %s19, 0
      %p116 = por %p114, %p115
      %p117 = scmp.ne.s32.totalorder %s109, %s111
      %p118 = scmp.eq.s32.totalorder %s24, 3
      %p119 = por %p117, %p118
      %p120 = scmp.ne.s32.totalorder %s111, %s112
      %p121 = scmp.eq.s32.totalorder %s24, 0
      %p122 = por %p120, %p121
      %p123 = scmp.ne.s32.totalorder %s111, %s112
      %p124 = scmp.eq.s32.totalorder %s25, 3
      %p125 = por %p123, %p124
      %p127 = scmp.ne.s32.totalorder %s112, %s126
      %p128 = scmp.eq.s32.totalorder %s25, 0
      %p129 = por %p127, %p128
      %s131 = sadd.s32 %s130, 1
      %p134 = scmp.eq.s32.totalorder %s19, 3
      %p135 = scmp.ne.s32.totalorder %s130, %s132
      %p136 = scmp.eq.s32.totalorder %s19, 0
      %p137 = por %p135, %p136
      %p138 = scmp.ne.s32.totalorder %s130, %s132
      %p139 = scmp.eq.s32.totalorder %s24, 3
      %p140 = por %p138, %p139
      %p141 = scmp.ne.s32.totalorder %s132, %s133
      %p142 = scmp.eq.s32.totalorder %s24, 0
      %p143 = por %p141, %p142
      %p144 = scmp.ne.s32.totalorder %s132, %s133
      %p145 = scmp.eq.s32.totalorder %s25, 3
      %p146 = por %p144, %p145
      %p148 = scmp.ne.s32.totalorder %s133, %s147
      %p149 = scmp.eq.s32.totalorder %s25, 0
      %p150 = por %p148, %p149
      %s151 = ssub.s32 %s26, %s38
      %s152 = ssub.s32 %s27, %s34
      %s153 = sor.u32 %s151, %s152
      %p154 = scmp.eq.s32.totalorder %s153, 0
      %s156 = sadd.s32 %s155, 1
      %s157 = scalar_select %p154, %s155, %s156
      %p160 = pneg %p154
      %p161 = scmp.eq.s32.totalorder %s19, 3
      %p162 = por %p160, %p161
      %p163 = scmp.ne.s32.totalorder %s155, %s158
      %p164 = scmp.eq.s32.totalorder %s19, 0
      %p165 = por %p163, %p164
      %p166 = scmp.ne.s32.totalorder %s155, %s158
      %p167 = scmp.eq.s32.totalorder %s24, 3
      %p168 = por %p166, %p167
      %p169 = scmp.ne.s32.totalorder %s158, %s159
      %p170 = scmp.eq.s32.totalorder %s24, 0
      %p171 = por %p169, %p170
      %p172 = scmp.ne.s32.totalorder %s158, %s159
      %p173 = scmp.eq.s32.totalorder %s25, 3
      %p174 = por %p172, %p173
      %p176 = scmp.ne.s32.totalorder %s159, %s175
      %p177 = scmp.eq.s32.totalorder %s25, 0
      %p178 = por %p176, %p177
      %s179 = ssub.s32 %s26, %s38
      %s180 = ssub.s32 %s27, %s34
      %s181 = sor.u32 %s179, %s180
      %p182 = scmp.eq.s32.totalorder %s181, 0
      %s184 = sadd.s32 %s183, 1
      %s185 = scalar_select %p182, %s183, %s184
      %p188 = pneg %p182
      %p189 = scmp.eq.s32.totalorder %s19, 3
      %p190 = por %p188, %p189
      %p191 = scmp.ne.s32.totalorder %s183, %s186
      %p192 = scmp.eq.s32.totalorder %s19, 0
      %p193 = por %p191, %p192
      %p194 = scmp.ne.s32.totalorder %s183, %s186
      %p195 = scmp.eq.s32.totalorder %s24, 3
      %p196 = por %p194, %p195
      %p197 = scmp.ne.s32.totalorder %s186, %s187
      %p198 = scmp.eq.s32.totalorder %s24, 0
      %p199 = por %p197, %p198
      %p200 = scmp.ne.s32.totalorder %s186, %s187
      %p201 = scmp.eq.s32.totalorder %s25, 3
      %p202 = por %p200, %p201
      %p204 = scmp.ne.s32.totalorder %s187, %s203
      %p205 = scmp.eq.s32.totalorder %s25, 0
      %p206 = por %p204, %p205
      %p207 = scmp.le.s32.totalorder 1, %s19
      %p208 = scmp.lt.s32.totalorder %s19, 5
      %p209 = pnand %p207, %p208
      %p210 = pneg %p209
      // Predicated region
      $region9: #{tpu_custom_call.1} parent=5 // pred_check
        _
      $region10: #{tpu_custom_call.1} parent=5 // pred_check_branch
        %212 = sbr.rel (%p209) target = $region12
      $region11: #{tpu_custom_call.1} parent=5 // pred_region
        %s213 = ssub.s32 %s19, 1
        // Predicated region
        $region13: #{tpu_custom_call.1} parent=11 // pred_check
          %p214 = pneg %p80
        $region14: #{tpu_custom_call.1} parent=11 // pred_check_branch
          %216 = sbr.rel (%p214) target = $region16
        $region15: #{tpu_custom_call.1} parent=11 // pred_region
          _
        $region16: #{tpu_custom_call.1} parent=11 // pred_fallthru
          _
        // Predicated region
        $region17: #{tpu_custom_call.1} parent=11 // pred_check
          %p217 = pneg %p101
        $region18: #{tpu_custom_call.1} parent=11 // pred_check_branch
          %219 = sbr.rel (%p217) target = $region20
        $region19: #{tpu_custom_call.1} parent=11 // pred_region
          _
        $region20: #{tpu_custom_call.1} parent=11 // pred_fallthru
          _
        // Predicated region
        $region21: #{tpu_custom_call.1} parent=11 // pred_check
          %p220 = pneg %p122
        $region22: #{tpu_custom_call.1} parent=11 // pred_check_branch
          %222 = sbr.rel (%p220) target = $region24
        $region23: #{tpu_custom_call.1} parent=11 // pred_region
          _
        $region24: #{tpu_custom_call.1} parent=11 // pred_fallthru
          _
        // Predicated region
        $region25: #{tpu_custom_call.1} parent=11 // pred_check
          %p223 = pneg %p143
        $region26: #{tpu_custom_call.1} parent=11 // pred_check_branch
          %225 = sbr.rel (%p223) target = $region28
        $region27: #{tpu_custom_call.1} parent=11 // pred_region
          _
        $region28: #{tpu_custom_call.1} parent=11 // pred_fallthru
          _
      $region12: #{tpu_custom_call.1} parent=5 // pred_fallthru
        _
      %p226 = scmp.lt.s32.totalorder %s19, 4
      // Predicated region
      $region29: #{tpu_custom_call.1} parent=5 // pred_check
        %p227 = pneg %p226
      $region30: #{tpu_custom_call.1} parent=5 // pred_check_branch
        %229 = sbr.rel (%p227) target = $region32
      $region31: #{tpu_custom_call.1} parent=5 // pred_region
        // Predicated region
        $region33: #{tpu_custom_call.1} parent=31 // pred_check
          %p230 = pneg %p53
        $region34: #{tpu_custom_call.1} parent=31 // pred_check_branch
          %232 = sbr.rel (%p230) target = $region36
        $region35: #{tpu_custom_call.1} parent=31 // pred_region
          %s233 = sand.u32 %s43, 1
          %s234 = scalar_lea.sflag [#allocation3], %s233
          %s235 = sand.u32 %s43, 1
          %s236 = smul.addr %s235, 64
          %s237 = scalar_lea.vmem [#allocation2], %s236
          %s239 = ssub.s32 1024, 1024
          %240 = vsyncadd %s234, %s239
          %s241 = smul.addr %s26, 16
          %s242 = sadd.s32 %s27, %s241
          %s243 = smul.addr %s242, 128
          %s244 = scalar_lea.hbm %s0, %s243
          %s245 = sshll.u32 %s237, 4
          %s246 = int_to_ptr.vmem [resolvable:$true] %s245
          %251 = dma.hbm_to_vmem [thread:$0]  %s244, 1024, %s246, %s234, 256, 128, 8
        $region36: #{tpu_custom_call.1} parent=31 // pred_fallthru
          _
      $region32: #{tpu_custom_call.1} parent=5 // pred_fallthru
        _
      %p252 = scmp.le.s32.totalorder 1, %s19
      %p253 = scmp.lt.s32.totalorder %s19, 5
      %p254 = pnand %p252, %p253
      %p255 = pneg %p254
      // Predicated region
      $region37: #{tpu_custom_call.1} parent=5 // pred_check
        _
      $region38: #{tpu_custom_call.1} parent=5 // pred_check_branch
        %257 = sbr.rel (%p254) target = $region40
      $region39: #{tpu_custom_call.1} parent=5 // pred_region
        %s258 = ssub.s32 %s19, 1
        %s259 = sand.u32 %s46, 1
        %s260 = scalar_lea.sflag [#allocation3], %s259
        %s261 = sand.u32 %s46, 1
        %s262 = smul.addr %s261, 64
        %s263 = scalar_lea.vmem [#allocation2], %s262
        // Predicated region
        $region41: #{tpu_custom_call.1} parent=39 // pred_check
          %p264 = pneg %p59
        $region42: #{tpu_custom_call.1} parent=39 // pred_check_branch
          %266 = sbr.rel (%p264) target = $region44
        $region43: #{tpu_custom_call.1} parent=39 // pred_region
          %267 = dma.done %s260, 1024
        $region44: #{tpu_custom_call.1} parent=39 // pred_fallthru
          _
        %s268 = sand.u32 %s46, 1
        %s269 = scalar_lea.sflag [#allocation3], %s268
        %s270 = sand.u32 %s46, 1
        %s271 = smul.addr %s270, 64
        %s272 = scalar_lea.vmem [#allocation2], %s271
        %p273 = pneg %p59
        %p274 = pneg %p56
        %p275 = pneg %p80
        %p276 = pneg %p77
        %p277 = pneg %p101
        %p278 = pneg %p98
        %p279 = pneg %p122
        %p280 = pneg %p119
        %p281 = pneg %p143
        %p282 = pneg %p140
        %p283 = pneg %p171
        %p284 = pneg %p168
        %s285 = smul.u32 16, %s29
        %p286 = scmp.lt.s32.totalorder %s28, 1
        %s287 = scalar_select %p286, %s28, 1
        %p288 = scmp.lt.s32.totalorder %s285, 31
        %s289 = scalar_select %p288, %s285, 31
        %s290 = smul.addr %s287, 32
        %s291 = sadd.s32 %s289, %s290
        %s292 = smul.addr %s291, 8
        %s293 = scalar_lea.vmem %s5, %s292
        %p294 = pneg %p199
        %p295 = pneg %p196
        %s296 = sand.u32 %s186, 1
        %s297 = scalar_lea.sflag [#allocation4], %s296
        %s298 = sand.u32 %s186, 1
        %s299 = smul.addr %s298, 64
        %s300 = scalar_lea.vmem [#allocation5], %s299
        %s301 = smul.u32 16, %s29
        %p302 = scmp.lt.s32.totalorder %s28, 1
        %s303 = scalar_select %p302, %s28, 1
        %p304 = scmp.lt.s32.totalorder %s301, 31
        %s305 = scalar_select %p304, %s301, 31
        %s306 = smul.addr %s303, 32
        %s307 = sadd.s32 %s305, %s306
        %s308 = smul.addr %s307, 8
        %s309 = scalar_lea.vmem %s5, %s308
        %s310 = smul.u32 16, %s29
        %v311 = vld [vmem:[%s263] sm:$0xff]
        %v312 = vld [vmem:[%s263 + $0x8] sm:$0xff]
        %v313 = vld [vmem:[%s263 + $0x10] sm:$0xff]
        %v314 = vld [vmem:[%s263 + $0x18] sm:$0xff]
        %v315 = vld [vmem:[%s263 + $0x20] sm:$0xff]
        %v316 = vld [vmem:[%s263 + $0x28] sm:$0xff]
        %v317 = vld [vmem:[%s263 + $0x30] sm:$0xff]
        %v318 = vld [vmem:[%s263 + $0x38] sm:$0xff]
        %v319 = vld [vmem:[%s1] sm:$0xff]
        %v320 = vld [vmem:[%s2] sm:$0xff]
        %322 = vset.pattern.permute.xlu0 0
        %323 = vperm.xlu0 %322, %v320
        %v324 = vpop.permute.xlu0 %323
        %vm326 = vcmask 523264
        %v328 = vsel %vm326, %v319, 0
        %330 = vmatprep.subr.mxu0 0.0
        %331 = vmatpush1.msra.mxu0 0.0
        %332 = vmatprep.subr.mxu0 0.0
        %333 = vmatpush1.msra.mxu0 0.0
        %334 = vmatprep.subr.mxu0 0.0
        %335 = vmatpush1.msra.mxu0 0.0
        %336 = vmatprep.subr.mxu0 0.0
        %337 = vmatpush1.msra.mxu0 0.0
        %338 = vmatprep.subr.mxu0 0.0
        %339 = vmatpush1.msra.mxu0 0.0
        %340 = vmatprep.subr.mxu0 0.0
        %341 = vmatpush1.msra.mxu0 0.0
        %342 = vmatprep.subr.mxu0 0.0
        %343 = vmatpush1.msra.mxu0 0.0
        %344 = vmatprep.subr.mxu0 0.0
        %345 = vmatpush1.msra.mxu0 0.0
        %346 = vmatprep.subr.mxu0 0.0
        %347 = vmatpush1.msra.mxu0 %v318
        %348 = vmatprep.subr.mxu0 0.0
        %349 = vmatpush1.msra.mxu0 %v317
        %350 = vmatprep.subr.mxu0 0.0
        %351 = vmatpush1.msra.mxu0 %v316
        %352 = vmatprep.subr.mxu0 0.0
        %353 = vmatpush1.msra.mxu0 %v315
        %354 = vmatprep.subr.mxu0 0.0
        %355 = vmatpush1.msra.mxu0 %v314
        %356 = vmatprep.subr.mxu0 0.0
        %357 = vmatpush1.msra.mxu0 %v313
        %358 = vmatprep.subr.mxu0 0.0
        %359 = vmatpush1.msra.mxu0 %v312
        %360 = vmatprep.subr.mxu0 0.0
        %361 = vmatpush1.msra.mxu0 %v311
        %362 = vmatprep.subr.mxu0 0.0
        %363 = vmatpush2.msra.mxu0 0.0
        %364 = vmatprep.subr.mxu0 0.0
        %365 = vmatpush2.msra.mxu0 0.0
        %366 = vmatprep.subr.mxu0 0.0
        %367 = vmatpush2.msra.mxu0 0.0
        %368 = vmatprep.subr.mxu0 0.0
        %369 = vmatpush2.msra.mxu0 0.0
        %370 = vmatprep.subr.mxu0 0.0
        %371 = vmatpush2.msra.mxu0 0.0
        %372 = vmatprep.subr.mxu0 0.0
        %373 = vmatpush2.msra.mxu0 0.0
        %374 = vmatprep.subr.mxu0 0.0
        %375 = vmatpush2.msra.mxu0 0.0
        %376 = vmatprep.subr.mxu0 0.0
        %377 = vmatpush2.msra.mxu0 0.0
        %378 = vmatprep.subr.mxu0 0.0
        %379 = vmatpush2.msra.mxu0 0.0
        %380 = vmatprep.subr.mxu0 0.0
        %381 = vmatpush2.msra.mxu0 0.0
        %382 = vmatprep.subr.mxu0 0.0
        %383 = vmatpush2.msra.mxu0 0.0
        %384 = vmatprep.subr.mxu0 0.0
        %385 = vmatpush2.msra.mxu0 0.0
        %386 = vmatprep.subr.mxu0 0.0
        %387 = vmatpush2.msra.mxu0 0.0
        %388 = vmatprep.subr.mxu0 0.0
        %389 = vmatpush2.msra.mxu0 0.0
        %390 = vmatprep.subr.mxu0 0.0
        %391 = vmatpush2.msra.mxu0 0.0
        %392 = vmatprep.subr.mxu0 0.0
        %393 = vmatpush2.msra.mxu0 0.0
        %394 = vmatprep.mubr.f32.mxu0 0.0
        %395 = vmatmul.mubr.f32.gmra.mxu0 %v328
        %v396 = vpop.f32.mrf.mxu0
        %v397 = vadd.f32 %v324, %v396
        %v398 = vpop.f32.mrf.mxu0
        %399 = vdwg.mxu0
        %v400 = vld [vmem:[%s3] sm:$0xff]
        %v401 = vld [vmem:[%s3 + $0x8] sm:$0xff]
        %v402 = vld [vmem:[%s3 + $0x10] sm:$0xff]
        %v403 = vld [vmem:[%s3 + $0x18] sm:$0xff]
        %v404 = vld [vmem:[%s3 + $0x20] sm:$0xff]
        %v405 = vld [vmem:[%s3 + $0x28] sm:$0xff]
        %v406 = vld [vmem:[%s3 + $0x30] sm:$0xff]
        %v407 = vld [vmem:[%s3 + $0x38] sm:$0xff]
        %v408 = vld [vmem:[%s4] sm:$0xff]
        %v409 = vld [vmem:[%s4 + $0x8] sm:$0xff]
        %v410 = vld [vmem:[%s4 + $0x10] sm:$0xff]
        %v411 = vld [vmem:[%s4 + $0x18] sm:$0xff]
        %v412 = vld [vmem:[%s4 + $0x20] sm:$0xff]
        %v413 = vld [vmem:[%s4 + $0x28] sm:$0xff]
        %v414 = vld [vmem:[%s4 + $0x30] sm:$0xff]
        %v415 = vld [vmem:[%s4 + $0x38] sm:$0xff]
        %417 = vset.pattern.permute.xlu0 0
        %418 = vperm.xlu0 %417, %v408
        %v419 = vpop.permute.xlu0 %418
        %422 = vset.pattern.permute.xlu0 0
        %423 = vperm.xlu0 %422, %v409
        %v424 = vpop.permute.xlu0 %423
        %427 = vset.pattern.permute.xlu0 0
        %428 = vperm.xlu0 %427, %v410
        %v429 = vpop.permute.xlu0 %428
        %432 = vset.pattern.permute.xlu0 0
        %433 = vperm.xlu0 %432, %v411
        %v434 = vpop.permute.xlu0 %433
        %437 = vset.pattern.permute.xlu0 0
        %438 = vperm.xlu0 %437, %v412
        %v439 = vpop.permute.xlu0 %438
        %442 = vset.pattern.permute.xlu0 0
        %443 = vperm.xlu0 %442, %v413
        %v444 = vpop.permute.xlu0 %443
        %447 = vset.pattern.permute.xlu0 0
        %448 = vperm.xlu0 %447, %v414
        %v449 = vpop.permute.xlu0 %448
        %452 = vset.pattern.permute.xlu0 0
        %453 = vperm.xlu0 %452, %v415
        %v454 = vpop.permute.xlu0 %453
        %v457 = vsel %vm326, %v400, 0
        %v460 = vsel %vm326, %v401, 0
        %v463 = vsel %vm326, %v402, 0
        %v466 = vsel %vm326, %v403, 0
        %v469 = vsel %vm326, %v404, 0
        %v472 = vsel %vm326, %v405, 0
        %v475 = vsel %vm326, %v406, 0
        %v478 = vsel %vm326, %v407, 0
        %480 = vmatprep.subr.mxu0 0.0
        %481 = vmatpush1.msra.mxu0 0.0
        %482 = vmatprep.subr.mxu0 0.0
        %483 = vmatpush1.msra.mxu0 0.0
        %484 = vmatprep.subr.mxu0 0.0
        %485 = vmatpush1.msra.mxu0 0.0
        %486 = vmatprep.subr.mxu0 0.0
        %487 = vmatpush1.msra.mxu0 0.0
        %488 = vmatprep.subr.mxu0 0.0
        %489 = vmatpush1.msra.mxu0 0.0
        %490 = vmatprep.subr.mxu0 0.0
        %491 = vmatpush1.msra.mxu0 0.0
        %492 = vmatprep.subr.mxu0 0.0
        %493 = vmatpush1.msra.mxu0 0.0
        %494 = vmatprep.subr.mxu0 0.0
        %495 = vmatpush1.msra.mxu0 0.0
        %496 = vmatprep.subr.mxu0 0.0
        %497 = vmatpush1.msra.mxu0 %v318
        %498 = vmatprep.subr.mxu0 0.0
        %499 = vmatpush1.msra.mxu0 %v317
        %500 = vmatprep.subr.mxu0 0.0
        %501 = vmatpush1.msra.mxu0 %v316
        %502 = vmatprep.subr.mxu0 0.0
        %503 = vmatpush1.msra.mxu0 %v315
        %504 = vmatprep.subr.mxu0 0.0
        %505 = vmatpush1.msra.mxu0 %v314
        %506 = vmatprep.subr.mxu0 0.0
        %507 = vmatpush1.msra.mxu0 %v313
        %508 = vmatprep.subr.mxu0 0.0
        %509 = vmatpush1.msra.mxu0 %v312
        %510 = vmatprep.subr.mxu0 0.0
        %511 = vmatpush1.msra.mxu0 %v311
        %512 = vmatprep.subr.mxu0 0.0
        %513 = vmatpush2.msra.mxu0 0.0
        %514 = vmatprep.subr.mxu0 0.0
        %515 = vmatpush2.msra.mxu0 0.0
        %516 = vmatprep.subr.mxu0 0.0
        %517 = vmatpush2.msra.mxu0 0.0
        %518 = vmatprep.subr.mxu0 0.0
        %519 = vmatpush2.msra.mxu0 0.0
        %520 = vmatprep.subr.mxu0 0.0
        %521 = vmatpush2.msra.mxu0 0.0
        %522 = vmatprep.subr.mxu0 0.0
        %523 = vmatpush2.msra.mxu0 0.0
        %524 = vmatprep.subr.mxu0 0.0
        %525 = vmatpush2.msra.mxu0 0.0
        %526 = vmatprep.subr.mxu0 0.0
        %527 = vmatpush2.msra.mxu0 0.0
        %528 = vmatprep.subr.mxu0 0.0
        %529 = vmatpush2.msra.mxu0 0.0
        %530 = vmatprep.subr.mxu0 0.0
        %531 = vmatpush2.msra.mxu0 0.0
        %532 = vmatprep.subr.mxu0 0.0
        %533 = vmatpush2.msra.mxu0 0.0
        %534 = vmatprep.subr.mxu0 0.0
        %535 = vmatpush2.msra.mxu0 0.0
        %536 = vmatprep.subr.mxu0 0.0
        %537 = vmatpush2.msra.mxu0 0.0
        %538 = vmatprep.subr.mxu0 0.0
        %539 = vmatpush2.msra.mxu0 0.0
        %540 = vmatprep.subr.mxu0 0.0
        %541 = vmatpush2.msra.mxu0 0.0
        %542 = vmatprep.subr.mxu0 0.0
        %543 = vmatpush2.msra.mxu0 0.0
        %544 = vmatprep.mubr.f32.mxu0 0.0
        %545 = vmatmul.mubr.f32.gmra.mxu0 %v457
        %v546 = vpop.f32.mrf.mxu0
        %v547 = vadd.f32 %v419, %v546
        %v548 = vpop.f32.mrf.mxu0
        %549 = vmatprep.mubr.f32.mxu0 0.0
        %550 = vmatmul.mubr.f32.gmra.mxu0 %v460
        %v551 = vpop.f32.mrf.mxu0
        %v552 = vadd.f32 %v424, %v551
        %v553 = vpop.f32.mrf.mxu0
        %554 = vmatprep.mubr.f32.mxu0 0.0
        %555 = vmatmul.mubr.f32.gmra.mxu0 %v463
        %v556 = vpop.f32.mrf.mxu0
        %v557 = vadd.f32 %v429, %v556
        %v558 = vpop.f32.mrf.mxu0
        %559 = vmatprep.mubr.f32.mxu0 0.0
        %560 = vmatmul.mubr.f32.gmra.mxu0 %v466
        %v561 = vpop.f32.mrf.mxu0
        %v562 = vadd.f32 %v434, %v561
        %v563 = vpop.f32.mrf.mxu0
        %564 = vmatprep.mubr.f32.mxu0 0.0
        %565 = vmatmul.mubr.f32.gmra.mxu0 %v469
        %v566 = vpop.f32.mrf.mxu0
        %v567 = vadd.f32 %v439, %v566
        %v568 = vpop.f32.mrf.mxu0
        %569 = vmatprep.mubr.f32.mxu0 0.0
        %570 = vmatmul.mubr.f32.gmra.mxu0 %v472
        %v571 = vpop.f32.mrf.mxu0
        %v572 = vadd.f32 %v444, %v571
        %v573 = vpop.f32.mrf.mxu0
        %574 = vmatprep.mubr.f32.mxu0 0.0
        %575 = vmatmul.mubr.f32.gmra.mxu0 %v475
        %v576 = vpop.f32.mrf.mxu0
        %v577 = vadd.f32 %v449, %v576
        %v578 = vpop.f32.mrf.mxu0
        %579 = vmatprep.mubr.f32.mxu0 0.0
        %580 = vmatmul.mubr.f32.gmra.mxu0 %v478
        %v581 = vpop.f32.mrf.mxu0
        %v582 = vadd.f32 %v454, %v581
        %v583 = vpop.f32.mrf.mxu0
        %584 = vdwg.mxu0
        %585 = vxpose.xlu0.b32.start [1/16] %v397, 128
        %586 = vxpose.xlu0.b32.cont [2/16] 0.0, 128
        %587 = vxpose.xlu0.b32.cont [3/16] 0.0, 128
        %588 = vxpose.xlu0.b32.cont [4/16] 0.0, 128
        %589 = vxpose.xlu0.b32.cont [5/16] 0.0, 128
        %590 = vxpose.xlu0.b32.cont [6/16] 0.0, 128
        %591 = vxpose.xlu0.b32.cont [7/16] 0.0, 128
        %592 = vxpose.xlu0.b32.cont [8/16] 0.0, 128
        %593 = vxpose.xlu0.b32.cont [9/16] 0.0, 128
        %594 = vxpose.xlu0.b32.cont [10/16] 0.0, 128
        %595 = vxpose.xlu0.b32.cont [11/16] 0.0, 128
        %596 = vxpose.xlu0.b32.cont [12/16] 0.0, 128
        %597 = vxpose.xlu0.b32.cont [13/16] 0.0, 128
        %598 = vxpose.xlu0.b32.cont [14/16] 0.0, 128
        %599 = vxpose.xlu0.b32.cont [15/16] 0.0, 128
        %600 = vxpose.xlu0.b32.end [16/16] 0.0, 128
        %v601 = vpop.trf.xlu0
        %v602 = vpop.trf.xlu0
        %v603 = vpop.trf.xlu0
        %v604 = vpop.trf.xlu0
        %v605 = vpop.trf.xlu0
        %v606 = vpop.trf.xlu0
        %v607 = vpop.trf.xlu0
        %v608 = vpop.trf.xlu0
        %v609 = vpop.trf.xlu0
        %v610 = vpop.trf.xlu0
        %v611 = vpop.trf.xlu0
        %v612 = vpop.trf.xlu0
        %v613 = vpop.trf.xlu0
        %v614 = vpop.trf.xlu0
        %v615 = vpop.trf.xlu0
        %v616 = vpop.trf.xlu0
        %vm617 = vcmask 64512
        %618 = vst.msk [vmem:[%s309] sm:$0xff] %vm617, %v601
        %619 = vst.msk [vmem:[%s309 + $0x8] sm:$0xff] %vm617, %v602
        %620 = vst.msk [vmem:[%s309 + $0x10] sm:$0xff] %vm617, %v603
        %621 = vst.msk [vmem:[%s309 + $0x18] sm:$0xff] %vm617, %v604
        %622 = vst.msk [vmem:[%s309 + $0x20] sm:$0xff] %vm617, %v605
        %623 = vst.msk [vmem:[%s309 + $0x28] sm:$0xff] %vm617, %v606
        %624 = vst.msk [vmem:[%s309 + $0x30] sm:$0xff] %vm617, %v607
        %625 = vst.msk [vmem:[%s309 + $0x38] sm:$0xff] %vm617, %v608
        %626 = vst.msk [vmem:[%s309 + $0x40] sm:$0xff] %vm617, %v609
        %627 = vst.msk [vmem:[%s309 + $0x48] sm:$0xff] %vm617, %v610
        %628 = vst.msk [vmem:[%s309 + $0x50] sm:$0xff] %vm617, %v611
        %629 = vst.msk [vmem:[%s309 + $0x58] sm:$0xff] %vm617, %v612
        %630 = vst.msk [vmem:[%s309 + $0x60] sm:$0xff] %vm617, %v613
        %631 = vst.msk [vmem:[%s309 + $0x68] sm:$0xff] %vm617, %v614
        %632 = vst.msk [vmem:[%s309 + $0x70] sm:$0xff] %vm617, %v615
        %633 = vst.msk [vmem:[%s309 + $0x78] sm:$0xff] %vm617, %v616
        %634 = vst [vmem:[%s300] sm:$0xff] %v547
        %635 = vst [vmem:[%s300 + $0x8] sm:$0xff] %v552
        %636 = vst [vmem:[%s300 + $0x10] sm:$0xff] %v557
        %637 = vst [vmem:[%s300 + $0x18] sm:$0xff] %v562
        %638 = vst [vmem:[%s300 + $0x20] sm:$0xff] %v567
        %639 = vst [vmem:[%s300 + $0x28] sm:$0xff] %v572
        %640 = vst [vmem:[%s300 + $0x30] sm:$0xff] %v577
        %641 = vst [vmem:[%s300 + $0x38] sm:$0xff] %v582
        %s642 = smul.u32 16, %s29
        %p643 = scmp.lt.s32.totalorder %s28, 1
        %s644 = scalar_select %p643, %s28, 1
        %p645 = scmp.lt.s32.totalorder %s642, 31
        %s646 = scalar_select %p645, %s642, 31
        %s647 = smul.addr %s644, 32
        %s648 = sadd.s32 %s646, %s647
        %s649 = smul.addr %s648, 8
        %s650 = scalar_lea.vmem %s5, %s649
        %s651 = sand.u32 %s186, 1
        %s652 = scalar_lea.sflag [#allocation4], %s651
        %s653 = sand.u32 %s186, 1
        %s654 = smul.addr %s653, 64
        %s655 = scalar_lea.vmem [#allocation5], %s654
        // Predicated region
        $region45: #{tpu_custom_call.1} parent=39 // pred_check
          %p656 = pneg %p168
        $region46: #{tpu_custom_call.1} parent=39 // pred_check_branch
          %658 = sbr.rel (%p656) target = $region48
        $region47: #{tpu_custom_call.1} parent=39 // pred_region
          %s659 = smul.u32 16, %s29
        $region48: #{tpu_custom_call.1} parent=39 // pred_fallthru
          _
        // Predicated region
        $region49: #{tpu_custom_call.1} parent=39 // pred_check
          %p660 = pneg %p196
        $region50: #{tpu_custom_call.1} parent=39 // pred_check_branch
          %662 = sbr.rel (%p660) target = $region52
        $region51: #{tpu_custom_call.1} parent=39 // pred_region
          %s664 = ssub.s32 1024, 1024
          %665 = vsyncadd %s652, %s664
          %s666 = smul.addr %s28, 16
          %s667 = sadd.s32 %s29, %s666
          %s668 = smul.addr %s667, 128
          %s669 = scalar_lea.hbm %s6, %s668
          %s670 = sshll.u32 %s655, 4
          %s671 = int_to_ptr.vmem [resolvable:$true] %s670
          %676 = dma.vmem_to_hbm [thread:$0]  %s671, 1024, %s669, %s652, 128, 256, 8
        $region52: #{tpu_custom_call.1} parent=39 // pred_fallthru
          _
      $region40: #{tpu_custom_call.1} parent=5 // pred_fallthru
        _
      %p677 = scmp.le.s32.totalorder 2, %s19
      // Predicated region
      $region53: #{tpu_custom_call.1} parent=5 // pred_check
        %p678 = pneg %p677
      $region54: #{tpu_custom_call.1} parent=5 // pred_check_branch
        %680 = sbr.rel (%p678) target = $region56
      $region55: #{tpu_custom_call.1} parent=5 // pred_region
        %s681 = ssub.s32 %s19, 2
        // Predicated region
        $region57: #{tpu_custom_call.1} parent=55 // pred_check
          %p682 = pneg %p174
        $region58: #{tpu_custom_call.1} parent=55 // pred_check_branch
          %684 = sbr.rel (%p682) target = $region60
        $region59: #{tpu_custom_call.1} parent=55 // pred_region
          %s685 = smul.u32 16, %s31
          %p686 = scmp.lt.s32.totalorder %s30, 1
          %s687 = scalar_select %p686, %s30, 1
          %p688 = scmp.lt.s32.totalorder %s685, 31
          %s689 = scalar_select %p688, %s685, 31
          %s690 = smul.addr %s687, 32
          %s691 = sadd.s32 %s689, %s690
          %s692 = smul.addr %s691, 8
          %s693 = scalar_lea.vmem %s5, %s692
        $region60: #{tpu_custom_call.1} parent=55 // pred_fallthru
          _
        // Predicated region
        $region61: #{tpu_custom_call.1} parent=55 // pred_check
          %p694 = pneg %p202
        $region62: #{tpu_custom_call.1} parent=55 // pred_check_branch
          %696 = sbr.rel (%p694) target = $region64
        $region63: #{tpu_custom_call.1} parent=55 // pred_region
          %s697 = sand.u32 %s187, 1
          %s698 = scalar_lea.sflag [#allocation4], %s697
          %s699 = sand.u32 %s187, 1
          %s700 = smul.addr %s699, 64
          %s701 = scalar_lea.vmem [#allocation5], %s700
          %702 = dma.done %s698, 1024
        $region64: #{tpu_custom_call.1} parent=55 // pred_fallthru
          _
      $region56: #{tpu_custom_call.1} parent=5 // pred_fallthru
        _
    $region6: #{tpu_custom_call.1} parent=1 // loop_footer
      %s23 = sadd.s32 1, %s19
    $region7: #{tpu_custom_call.1} parent=1 // loop_footer_branch
      %18 = sbr.rel target = $region3
    $region8: #{tpu_custom_call.1} parent=1 // loop_exit
      _
    %703 = vsyncpa [#allocation3], 1
    %s704 = scalar_lea.sflag [#allocation3], 1
    %705 = vsyncpa %s704, 1
    %706 = vsyncpa [#allocation4], 1
    %s707 = scalar_lea.sflag [#allocation4], 1
    %708 = vsyncpa %s707, 1

</llo_original>
